<compile_context>
chip_gen: v6e
topology: v6e:2x2x1
jax: 0.10.0
libtpu: 0.0.40
codegen_flags: <defaults>
</compile_context>

<pallas_src>
import functools

import jax
import jax.numpy as jnp
from jax import lax
from jax.experimental import pallas as pl
from jax.experimental.pallas import tpu as pltpu


def _round_up(n, m):
    return ((n + m - 1) // m) * m


def _vmem_capacity_bytes():
    """Best-effort per-core VMEM capacity; falls back to the v7x minimum."""
    try:
        return int(pltpu.get_tpu_info().vmem_capacity_bytes)
    except Exception:  # narrow purpose: hw-info query only, never the kernel
        return 64 << 20


# --------------------------------------------------------------------------
# Kernel
# --------------------------------------------------------------------------
def _attention_autoencoder_kernel(
    x_ref,      # (TB, Dp)  activations tile (native dtype, cast in-kernel)
    w_enc_ref,  # (Dp, Hp)  compute dtype (bf16 or f32)
    b_enc_ref,  # (1, Hp)   f32
    w_att_ref,  # (Hp, Hp)
    b_att_ref,  # (1, Hp)   f32
    w_dec_ref,  # (Hp, Dp)
    b_dec_ref,  # (1, Dp)   f32
    out_ref,    # (TB, Dp)
    *,
    compute_dtype,
    precision,
):
    x = x_ref[...].astype(compute_dtype)

    # encoder: Linear + ReLU (MXU accumulates in f32)
    z = jnp.dot(x, w_enc_ref[...],
                preferred_element_type=jnp.float32, precision=precision)
    z = jnp.maximum(z + b_enc_ref[...], 0.0)

    # feature attention: sigmoid(Linear(z)) * z  (elementwise kept in f32)
    a = jnp.dot(z.astype(compute_dtype), w_att_ref[...],
                preferred_element_type=jnp.float32, precision=precision)
    gate = jax.nn.sigmoid(a + b_att_ref[...])
    z_att = z * gate

    # decoder: Linear
    r = jnp.dot(z_att.astype(compute_dtype), w_dec_ref[...],
                preferred_element_type=jnp.float32, precision=precision)
    out_ref[...] = (r + b_dec_ref[...]).astype(out_ref.dtype)


# --------------------------------------------------------------------------
# One-time parameter preparation (hoisted out of the per-call path)
# --------------------------------------------------------------------------
def prepare_params(params, *, use_bf16_matmul=True):
    """Pad/cast weights once. Returns (prepared arrays, static meta)."""
    d_in, h = params["w_enc"].shape
    hp = _round_up(h, 128)
    # Only lane-pad the streamed feature dim when the blow-up is <= 2x;
    # otherwise keep the true D (full-dim blocks are legal, masked stores on a
    # narrow output beat 8x the HBM bytes for a mem-bound op).
    dp128 = _round_up(d_in, 128)
    dp = dp128 if dp128 <= 2 * d_in else d_in

    wdt = jnp.bfloat16 if use_bf16_matmul else jnp.float32

    def pad2(a, rows, cols):
        return jnp.pad(a, ((0, rows - a.shape[0]), (0, cols - a.shape[1])))

    prep = {
        "w_enc": pad2(params["w_enc"], dp, hp).astype(wdt),
        "w_att": pad2(params["w_att"], hp, hp).astype(wdt),
        "w_dec": pad2(params["w_dec"], hp, dp).astype(wdt),
        # biases stay f32 (added to the f32 accumulators)
        "b_enc": jnp.pad(params["b_enc"], (0, hp - h)).reshape(1, hp).astype(jnp.float32),
        "b_att": jnp.pad(params["b_att"], (0, hp - h)).reshape(1, hp).astype(jnp.float32),
        "b_dec": jnp.pad(params["b_dec"], (0, dp - d_in)).reshape(1, dp).astype(jnp.float32),
    }
    meta = {"d_in": d_in, "hidden": h, "d_pad": dp, "h_pad": hp,
            "compute_dtype": wdt}
    return prep, meta


# --------------------------------------------------------------------------
# Forward wrapper
# --------------------------------------------------------------------------
def attention_autoencoder(x, prep, meta, *, batch_tile=None, precision=None,
                          out_dtype=None):
    """x: (..., D_in).  prep/meta from prepare_params()."""
    d_in, hp, dp = meta["d_in"], meta["h_pad"], meta["d_pad"]
    compute_dtype = meta["compute_dtype"]

    lead_shape = x.shape[:-1]
    x2 = x.reshape(-1, x.shape[-1])
    B = x2.shape[0]
    assert x2.shape[1] == d_in, (x.shape, d_in)

    out_dtype = x.dtype if out_dtype is None else out_dtype

    # Feature-dim padding only if prepare_params chose a padded layout
    # (never at demo shapes). No batch padding: grid = cdiv handles the tail.
    x_in = x2 if dp == d_in else jnp.pad(x2, ((0, 0), (0, dp - d_in)))

    # ---- VMEM budget (streamed tiles + resident weights + intermediates) ----
    c_sz = jnp.dtype(compute_dtype).itemsize
    x_sz = jnp.dtype(x.dtype).itemsize
    o_sz = jnp.dtype(out_dtype).itemsize

    vmem_cap = _vmem_capacity_bytes()
    # weights are double-buffered block allocations (constant index_map => no
    # per-step re-DMA, just a second buffer)
    w_bytes = 2 * ((dp * hp + hp * hp + hp * dp) * c_sz + (2 * hp + dp) * 4)
    # per-row: x/out tiles (double-buffered) + z/gate in f32 + bf16 casts + r
    per_row = dp * (2 * x_sz + 2 * o_sz + 4) + hp * (8 + 2 * c_sz)

    if batch_tile is None:
        bt = _round_up(pl.cdiv(B, 8), 8)        # aim for ~8 grid steps
        bt = max(bt, 256)                       # fill 256x256 MXU (v6e/v7x)
        batch_tile = min(bt, _round_up(B, 8))
    batch_tile = max(8, _round_up(batch_tile, 8))
    vmem_budget = int(0.8 * vmem_cap) - w_bytes
    max_bt = max(8, (vmem_budget // per_row) // 8 * 8)
    batch_tile = min(batch_tile, max_bt)

    grid = (pl.cdiv(B, batch_tile),)

    vmem_limit = int(1.3 * (w_bytes + batch_tile * per_row)) + (4 << 20)
    vmem_limit = min(max(vmem_limit, 16 << 20), int(0.9 * vmem_cap))

    flops = 2 * B * (dp * hp + hp * hp + hp * dp)
    bytes_accessed = B * dp * (x_sz + o_sz) + w_bytes // 2
    cost = pl.CostEstimate(flops=flops, transcendentals=B * hp,
                           bytes_accessed=int(bytes_accessed))

    kernel = functools.partial(_attention_autoencoder_kernel,
                               compute_dtype=compute_dtype,
                               precision=precision)

    out = pl.pallas_call(
        kernel,
        out_shape=jax.ShapeDtypeStruct((B, dp), out_dtype),
        grid_spec=pltpu.PrefetchScalarGridSpec(
            num_scalar_prefetch=0,
            grid=grid,
            in_specs=[
                pl.BlockSpec((batch_tile, dp), lambda i: (i, 0)),   # x tile
                pl.BlockSpec((dp, hp), lambda i: (0, 0)),           # w_enc
                pl.BlockSpec((1, hp), lambda i: (0, 0)),            # b_enc
                pl.BlockSpec((hp, hp), lambda i: (0, 0)),           # w_att
                pl.BlockSpec((1, hp), lambda i: (0, 0)),            # b_att
                pl.BlockSpec((hp, dp), lambda i: (0, 0)),           # w_dec
                pl.BlockSpec((1, dp), lambda i: (0, 0)),            # b_dec
            ],
            out_specs=pl.BlockSpec((batch_tile, dp), lambda i: (i, 0)),
        ),
        compiler_params=pltpu.CompilerParams(
            dimension_semantics=("parallel",),
            vmem_limit_bytes=vmem_limit,
        ),
        cost_estimate=cost,
    )(x_in, prep["w_enc"], prep["b_enc"], prep["w_att"], prep["b_att"],
      prep["w_dec"], prep["b_dec"])

    if dp != d_in:
        out = out[:, :d_in]
    return out.reshape(*lead_shape, d_in)


# --------------------------------------------------------------------------
# Reference / init helpers
# --------------------------------------------------------------------------
def init_params(key, input_dim, hidden_dim):
    """Mimics torch.nn.Linear default init: U[-1/sqrt(fan_in), +1/sqrt(fan_in)]."""
    ks = jax.random.split(key, 6)

    def uniform(k, shape, fan_in):
        bound = 1.0 / jnp.sqrt(jnp.float32(fan_in))
        return jax.random.uniform(k, shape, jnp.float32, -bound, bound)

    return {
        # stored as (in, out) so the kernel does x @ W
        "w_enc": uniform(ks[0], (input_dim, hidden_dim), input_dim),
        "b_enc": uniform(ks[1], (hidden_dim,), input_dim),
        "w_att": uniform(ks[2], (hidden_dim, hidden_dim), hidden_dim),
        "b_att": uniform(ks[3], (hidden_dim,), hidden_dim),
        "w_dec": uniform(ks[4], (hidden_dim, input_dim), hidden_dim),
        "b_dec": uniform(ks[5], (input_dim,), hidden_dim),
    }


def reference_forward(x, params):
    """Pure-JAX reference matching the PyTorch module semantics (full f32)."""
    hp = lax.Precision.HIGHEST
    z = jnp.maximum(jnp.dot(x, params["w_enc"], precision=hp) + params["b_enc"], 0.0)
    gate = jax.nn.sigmoid(jnp.dot(z, params["w_att"], precision=hp) + params["b_att"])
    z_att = z * gate
    return jnp.dot(z_att, params["w_dec"], precision=hp) + params["b_dec"]


if __name__ == "__main__":
    input_dim = 16
    hidden_dim = 32
    batch = 512

    key = jax.random.PRNGKey(0)
    k_x, k_p = jax.random.split(key)

    x = jax.random.normal(k_x, (batch, input_dim), jnp.float32)
    params = init_params(k_p, input_dim, hidden_dim)
    ref = reference_forward(x, params)

    # Default path: bf16 MXU operands, f32 accumulation (fast on v5e/v6e/v7x).
    prep_bf16, meta_bf16 = prepare_params(params, use_bf16_matmul=True)
    out = attention_autoencoder(x, prep_bf16, meta_bf16)
    out = jax.block_until_ready(out)
    assert out.shape == (batch, input_dim), out.shape
    err = float(jnp.max(jnp.abs(out - ref)))
    assert err < 0.1, f"bf16 path mismatch vs reference: max abs err {err}"

    # f32 operands + explicit HIGHEST precision: tight numerical check of the
    # kernel plumbing (not the perf default).
    prep_f32, meta_f32 = prepare_params(params, use_bf16_matmul=False)
    out_f32 = attention_autoencoder(x, prep_f32, meta_f32,
                                    precision=lax.Precision.HIGHEST)
    out_f32 = jax.block_until_ready(out_f32)
    assert out_f32.shape == (batch, input_dim), out_f32.shape
    err_f32 = float(jnp.max(jnp.abs(out_f32 - ref)))
    assert err_f32 < 1e-4, f"f32 path mismatch vs reference: max abs err {err_f32}"

    print("KERNEL_OK")
</pallas_src>

<mosaic_0001>
module attributes {stable_mosaic.version = 11 : i64} {
  func.func @_attention_autoencoder_kernel(%arg0: i32, %arg1: memref<256x16xf32, #tpu.memory_space<vmem>>, %arg2: memref<16x128xbf16, #tpu.memory_space<vmem>>, %arg3: memref<1x128xf32, #tpu.memory_space<vmem>>, %arg4: memref<128x128xbf16, #tpu.memory_space<vmem>>, %arg5: memref<1x128xf32, #tpu.memory_space<vmem>>, %arg6: memref<128x16xbf16, #tpu.memory_space<vmem>>, %arg7: memref<1x16xf32, #tpu.memory_space<vmem>>, %arg8: memref<256x16xf32, #tpu.memory_space<vmem>>) attributes {dimension_semantics = [#tpu.dimension_semantics<parallel>], iteration_bounds = array<i64: 2>, scalar_prefetch = 0 : i64, scratch_operands = 0 : i64, tpu.core_type = #tpu.core_type<tc>, window_params = [{transform_indices = @transform_0, window_bounds = array<i64: 256, 16>}, {pipeline_mode = #tpu.pipeline_mode<synchronous>, transform_indices = @transform_1, window_bounds = array<i64: 16, 128>}, {pipeline_mode = #tpu.pipeline_mode<synchronous>, transform_indices = @transform_2, window_bounds = array<i64: 1, 128>}, {pipeline_mode = #tpu.pipeline_mode<synchronous>, transform_indices = @transform_3, window_bounds = array<i64: 128, 128>}, {pipeline_mode = #tpu.pipeline_mode<synchronous>, transform_indices = @transform_4, window_bounds = array<i64: 1, 128>}, {pipeline_mode = #tpu.pipeline_mode<synchronous>, transform_indices = @transform_5, window_bounds = array<i64: 128, 16>}, {pipeline_mode = #tpu.pipeline_mode<synchronous>, transform_indices = @transform_6, window_bounds = array<i64: 1, 16>}, {transform_indices = @transform_7, window_bounds = array<i64: 256, 16>}]} {
    %c0 = arith.constant 0 : index
    %c0_0 = arith.constant 0 : index
    %0 = vector.load %arg1[%c0, %c0_0] : memref<256x16xf32, #tpu.memory_space<vmem>>, vector<256x16xf32>
    %1 = arith.truncf %0 : vector<256x16xf32> to vector<256x16xbf16>
    %c0_1 = arith.constant 0 : index
    %c0_2 = arith.constant 0 : index
    %2 = vector.load %arg2[%c0_1, %c0_2] : memref<16x128xbf16, #tpu.memory_space<vmem>>, vector<16x128xbf16>
    %cst = arith.constant dense<0.000000e+00> : vector<256x128xf32>
    %3 = tpu.matmul %1, %2, %cst {dimension_numbers = #tpu.dot_dimension_numbers<[1], [0], [0], [1], [0, 0, 1, 1], [], []>} : vector<256x16xbf16>, vector<16x128xbf16>, vector<256x128xf32> -> vector<256x128xf32>
    %c0_3 = arith.constant 0 : index
    %c0_4 = arith.constant 0 : index
    %4 = vector.load %arg3[%c0_3, %c0_4] : memref<1x128xf32, #tpu.memory_space<vmem>>, vector<1x128xf32>
    %5 = vector.broadcast %4 : vector<1x128xf32> to vector<256x128xf32>
    %6 = arith.addf %3, %5 : vector<256x128xf32>
    %cst_5 = arith.constant 0.000000e+00 : f32
    %7 = vector.broadcast %cst_5 : f32 to vector<256x128xf32>
    %8 = arith.maximumf %6, %7 : vector<256x128xf32>
    %9 = arith.truncf %8 : vector<256x128xf32> to vector<256x128xbf16>
    %c0_6 = arith.constant 0 : index
    %c0_7 = arith.constant 0 : index
    %10 = vector.load %arg4[%c0_6, %c0_7] : memref<128x128xbf16, #tpu.memory_space<vmem>>, vector<128x128xbf16>
    %cst_8 = arith.constant dense<0.000000e+00> : vector<256x128xf32>
    %11 = tpu.matmul %9, %10, %cst_8 {dimension_numbers = #tpu.dot_dimension_numbers<[1], [0], [0], [1], [0, 0, 1, 1], [], []>} : vector<256x128xbf16>, vector<128x128xbf16>, vector<256x128xf32> -> vector<256x128xf32>
    %c0_9 = arith.constant 0 : index
    %c0_10 = arith.constant 0 : index
    %12 = vector.load %arg5[%c0_9, %c0_10] : memref<1x128xf32, #tpu.memory_space<vmem>>, vector<1x128xf32>
    %13 = vector.broadcast %12 : vector<1x128xf32> to vector<256x128xf32>
    %14 = arith.addf %11, %13 : vector<256x128xf32>
    %15 = arith.negf %14 : vector<256x128xf32>
    %16 = math.exp %15 : vector<256x128xf32>
    %cst_11 = arith.constant 1.000000e+00 : f32
    %17 = vector.broadcast %cst_11 : f32 to vector<256x128xf32>
    %18 = arith.addf %17, %16 : vector<256x128xf32>
    %19 = arith.divf %17, %18 : vector<256x128xf32>
    %20 = arith.mulf %8, %19 : vector<256x128xf32>
    %21 = arith.truncf %20 : vector<256x128xf32> to vector<256x128xbf16>
    %c0_12 = arith.constant 0 : index
    %c0_13 = arith.constant 0 : index
    %22 = vector.load %arg6[%c0_12, %c0_13] : memref<128x16xbf16, #tpu.memory_space<vmem>>, vector<128x16xbf16>
    %cst_14 = arith.constant dense<0.000000e+00> : vector<256x16xf32>
    %23 = tpu.matmul %21, %22, %cst_14 {dimension_numbers = #tpu.dot_dimension_numbers<[1], [0], [0], [1], [0, 0, 1, 1], [], []>} : vector<256x128xbf16>, vector<128x16xbf16>, vector<256x16xf32> -> vector<256x16xf32>
    %c0_15 = arith.constant 0 : index
    %c0_16 = arith.constant 0 : index
    %24 = vector.load %arg7[%c0_15, %c0_16] : memref<1x16xf32, #tpu.memory_space<vmem>>, vector<1x16xf32>
    %25 = vector.broadcast %24 : vector<1x16xf32> to vector<256x16xf32>
    %26 = arith.addf %23, %25 : vector<256x16xf32>
    %c0_17 = arith.constant 0 : index
    %c0_18 = arith.constant 0 : index
    %27 = vector.load %arg8[%c0_17, %c0_18] : memref<256x16xf32, #tpu.memory_space<vmem>>, vector<256x16xf32>
    tpu.vector_store %arg8[%c0_17, %c0_18], %26 {strides = array<i32>} : memref<256x16xf32, #tpu.memory_space<vmem>>, vector<256x16xf32>,
    return
  }
  func.func @transform_0(%arg0: i32) -> (i32, i32) {
    %c0_i32 = arith.constant 0 : i32
    %c0_i32_0 = arith.constant 0 : i32
    return %arg0, %c0_i32 : i32, i32
  }
  func.func @transform_1(%arg0: i32) -> (i32, i32) {
    %c0_i32 = arith.constant 0 : i32
    %c0_i32_0 = arith.constant 0 : i32
    %c0_i32_1 = arith.constant 0 : i32
    return %c0_i32, %c0_i32_0 : i32, i32
  }
  func.func @transform_2(%arg0: i32) -> (i32, i32) {
    %c0_i32 = arith.constant 0 : i32
    %c0_i32_0 = arith.constant 0 : i32
    %c0_i32_1 = arith.constant 0 : i32
    return %c0_i32, %c0_i32_0 : i32, i32
  }
  func.func @transform_3(%arg0: i32) -> (i32, i32) {
    %c0_i32 = arith.constant 0 : i32
    %c0_i32_0 = arith.constant 0 : i32
    %c0_i32_1 = arith.constant 0 : i32
    return %c0_i32, %c0_i32_0 : i32, i32
  }
  func.func @transform_4(%arg0: i32) -> (i32, i32) {
    %c0_i32 = arith.constant 0 : i32
    %c0_i32_0 = arith.constant 0 : i32
    %c0_i32_1 = arith.constant 0 : i32
    return %c0_i32, %c0_i32_0 : i32, i32
  }
  func.func @transform_5(%arg0: i32) -> (i32, i32) {
    %c0_i32 = arith.constant 0 : i32
    %c0_i32_0 = arith.constant 0 : i32
    %c0_i32_1 = arith.constant 0 : i32
    return %c0_i32, %c0_i32_0 : i32, i32
  }
  func.func @transform_6(%arg0: i32) -> (i32, i32) {
    %c0_i32 = arith.constant 0 : i32
    %c0_i32_0 = arith.constant 0 : i32
    %c0_i32_1 = arith.constant 0 : i32
    return %c0_i32, %c0_i32_0 : i32, i32
  }
  func.func @transform_7(%arg0: i32) -> (i32, i32) {
    %c0_i32 = arith.constant 0 : i32
    %c0_i32_0 = arith.constant 0 : i32
    return %arg0, %c0_i32 : i32, i32
  }
}

</mosaic_0001>

<llo_original>
// kernel: tpu_custom_call.1
$region0: #{tpu_custom_call.1}
  #allocation0 [shape = 'u32[]', space=smem, size = 0x4, offset = 0x4, fixed_abs, tag = 'smem constant byte address 0x4 - core index']
  #allocation1 [shape = 'u32[144,128]{1,0:T(1,128)}', space=vmem, size = 0x12000, scoped, tag = 'internal scratch']
  %s0 = inlined_call_operand.vmem [shape: f32[512,16], index: 0, kind: input, shape index: {}]
  %s1 = inlined_call_operand.vmem [shape: bf16[16,128], index: 1, kind: input, shape index: {}]
  %s2 = inlined_call_operand.vmem [shape: f32[1,128], index: 2, kind: input, shape index: {}]
  %s3 = inlined_call_operand.vmem [shape: bf16[128,128], index: 3, kind: input, shape index: {}]
  %s4 = inlined_call_operand.vmem [shape: f32[1,128], index: 4, kind: input, shape index: {}]
  %s5 = inlined_call_operand.vmem [shape: bf16[128,16], index: 5, kind: input, shape index: {}]
  %s6 = inlined_call_operand.vmem [shape: f32[1,16], index: 6, kind: input, shape index: {}]
  %s7 = inlined_call_operand.vmem [shape: f32[512,16], index: 7, kind: output, shape index: {}]
  %s8 = sld [smem:[#allocation0]]
  $region61: #{tpu_custom_call.1} parent=0
    _
  %s10 = ssub.s32 1, %s8
  %s11 = scalar_select 0, %s10, %s8
  loop: start=0, step=1, limit=4
  $region2: #{tpu_custom_call.1} parent=0 // loop_pre_header
    _
  $region3: #{tpu_custom_call.1} parent=0 // loop_header
    %s13 = sphi 0, %s17
    %p14 = scmp.ge.s32.totalorder %s13, 4
    %s23 = sphi 0, %s25
    %s26 = sphi 0, %s23
    %s27 = sphi 0, %s26
    %s43 = sphi 0, %s27
    %s47 = sphi 0, %s47
    %s49 = sphi 0, %s47
    %s50 = sphi 0, %s49
    %s64 = sphi 0, %s50
    %s68 = sphi 0, %s68
    %s70 = sphi 0, %s68
    %s71 = sphi 0, %s70
    %s85 = sphi 0, %s71
    %s89 = sphi 0, %s89
    %s91 = sphi 0, %s89
    %s92 = sphi 0, %s91
    %s106 = sphi 0, %s92
    %s110 = sphi 0, %s110
    %s112 = sphi 0, %s110
    %s113 = sphi 0, %s112
    %s127 = sphi 0, %s113
    %s131 = sphi 0, %s131
    %s133 = sphi 0, %s131
    %s134 = sphi 0, %s133
    %s148 = sphi 0, %s134
    %s152 = sphi 0, %s152
    %s154 = sphi 0, %s152
    %s155 = sphi 0, %s154
    %s169 = sphi 0, %s155
    %s175 = sphi 0, %s177
    %s178 = sphi 0, %s175
    %s179 = sphi 0, %s178
    %s195 = sphi 0, %s179
  $region4: #{tpu_custom_call.1} parent=0 // loop_header_branch
    %16 = sbr.rel (%p14) target = $region8
  $region5: #{tpu_custom_call.1} parent=0 // loop_body
    %s18 = ssub.s32 %s13, 1
    %s19 = ssub.s32 %s13, 2
    %s20 = sadd.s32 %s13, 1
    %s21 = ssub.s32 %s13, %s20
    %p22 = scmp.eq.s32.totalorder %s21, 0
    %s24 = sadd.s32 %s23, 1
    %s25 = scalar_select %p22, %s23, %s24
    %p28 = pneg %p22
    %p29 = scmp.eq.s32.totalorder %s13, 1
    %p30 = por %p28, %p29
    %p31 = scmp.ne.s32.totalorder %s23, %s26
    %p32 = scmp.eq.s32.totalorder %s13, 0
    %p33 = por %p31, %p32
    %p34 = scmp.ne.s32.totalorder %s23, %s26
    %p35 = scmp.eq.s32.totalorder %s18, 1
    %p36 = por %p34, %p35
    %p37 = scmp.ne.s32.totalorder %s26, %s27
    %p38 = scmp.eq.s32.totalorder %s18, 0
    %p39 = por %p37, %p38
    %p40 = scmp.ne.s32.totalorder %s26, %s27
    %p41 = scmp.eq.s32.totalorder %s19, 1
    %p42 = por %p40, %p41
    %p44 = scmp.ne.s32.totalorder %s27, %s43
    %p45 = scmp.eq.s32.totalorder %s19, 0
    %p46 = por %p44, %p45
    %s48 = sadd.s32 %s47, 1
    %p51 = scmp.eq.s32.totalorder %s13, 1
    %p52 = scmp.ne.s32.totalorder %s47, %s49
    %p53 = scmp.eq.s32.totalorder %s13, 0
    %p54 = por %p52, %p53
    %p55 = scmp.ne.s32.totalorder %s47, %s49
    %p56 = scmp.eq.s32.totalorder %s18, 1
    %p57 = por %p55, %p56
    %p58 = scmp.ne.s32.totalorder %s49, %s50
    %p59 = scmp.eq.s32.totalorder %s18, 0
    %p60 = por %p58, %p59
    %p61 = scmp.ne.s32.totalorder %s49, %s50
    %p62 = scmp.eq.s32.totalorder %s19, 1
    %p63 = por %p61, %p62
    %p65 = scmp.ne.s32.totalorder %s50, %s64
    %p66 = scmp.eq.s32.totalorder %s19, 0
    %p67 = por %p65, %p66
    %s69 = sadd.s32 %s68, 1
    %p72 = scmp.eq.s32.totalorder %s13, 1
    %p73 = scmp.ne.s32.totalorder %s68, %s70
    %p74 = scmp.eq.s32.totalorder %s13, 0
    %p75 = por %p73, %p74
    %p76 = scmp.ne.s32.totalorder %s68, %s70
    %p77 = scmp.eq.s32.totalorder %s18, 1
    %p78 = por %p76, %p77
    %p79 = scmp.ne.s32.totalorder %s70, %s71
    %p80 = scmp.eq.s32.totalorder %s18, 0
    %p81 = por %p79, %p80
    %p82 = scmp.ne.s32.totalorder %s70, %s71
    %p83 = scmp.eq.s32.totalorder %s19, 1
    %p84 = por %p82, %p83
    %p86 = scmp.ne.s32.totalorder %s71, %s85
    %p87 = scmp.eq.s32.totalorder %s19, 0
    %p88 = por %p86, %p87
    %s90 = sadd.s32 %s89, 1
    %p93 = scmp.eq.s32.totalorder %s13, 1
    %p94 = scmp.ne.s32.totalorder %s89, %s91
    %p95 = scmp.eq.s32.totalorder %s13, 0
    %p96 = por %p94, %p95
    %p97 = scmp.ne.s32.totalorder %s89, %s91
    %p98 = scmp.eq.s32.totalorder %s18, 1
    %p99 = por %p97, %p98
    %p100 = scmp.ne.s32.totalorder %s91, %s92
    %p101 = scmp.eq.s32.totalorder %s18, 0
    %p102 = por %p100, %p101
    %p103 = scmp.ne.s32.totalorder %s91, %s92
    %p104 = scmp.eq.s32.totalorder %s19, 1
    %p105 = por %p103, %p104
    %p107 = scmp.ne.s32.totalorder %s92, %s106
    %p108 = scmp.eq.s32.totalorder %s19, 0
    %p109 = por %p107, %p108
    %s111 = sadd.s32 %s110, 1
    %p114 = scmp.eq.s32.totalorder %s13, 1
    %p115 = scmp.ne.s32.totalorder %s110, %s112
    %p116 = scmp.eq.s32.totalorder %s13, 0
    %p117 = por %p115, %p116
    %p118 = scmp.ne.s32.totalorder %s110, %s112
    %p119 = scmp.eq.s32.totalorder %s18, 1
    %p120 = por %p118, %p119
    %p121 = scmp.ne.s32.totalorder %s112, %s113
    %p122 = scmp.eq.s32.totalorder %s18, 0
    %p123 = por %p121, %p122
    %p124 = scmp.ne.s32.totalorder %s112, %s113
    %p125 = scmp.eq.s32.totalorder %s19, 1
    %p126 = por %p124, %p125
    %p128 = scmp.ne.s32.totalorder %s113, %s127
    %p129 = scmp.eq.s32.totalorder %s19, 0
    %p130 = por %p128, %p129
    %s132 = sadd.s32 %s131, 1
    %p135 = scmp.eq.s32.totalorder %s13, 1
    %p136 = scmp.ne.s32.totalorder %s131, %s133
    %p137 = scmp.eq.s32.totalorder %s13, 0
    %p138 = por %p136, %p137
    %p139 = scmp.ne.s32.totalorder %s131, %s133
    %p140 = scmp.eq.s32.totalorder %s18, 1
    %p141 = por %p139, %p140
    %p142 = scmp.ne.s32.totalorder %s133, %s134
    %p143 = scmp.eq.s32.totalorder %s18, 0
    %p144 = por %p142, %p143
    %p145 = scmp.ne.s32.totalorder %s133, %s134
    %p146 = scmp.eq.s32.totalorder %s19, 1
    %p147 = por %p145, %p146
    %p149 = scmp.ne.s32.totalorder %s134, %s148
    %p150 = scmp.eq.s32.totalorder %s19, 0
    %p151 = por %p149, %p150
    %s153 = sadd.s32 %s152, 1
    %p156 = scmp.eq.s32.totalorder %s13, 1
    %p157 = scmp.ne.s32.totalorder %s152, %s154
    %p158 = scmp.eq.s32.totalorder %s13, 0
    %p159 = por %p157, %p158
    %p160 = scmp.ne.s32.totalorder %s152, %s154
    %p161 = scmp.eq.s32.totalorder %s18, 1
    %p162 = por %p160, %p161
    %p163 = scmp.ne.s32.totalorder %s154, %s155
    %p164 = scmp.eq.s32.totalorder %s18, 0
    %p165 = por %p163, %p164
    %p166 = scmp.ne.s32.totalorder %s154, %s155
    %p167 = scmp.eq.s32.totalorder %s19, 1
    %p168 = por %p166, %p167
    %p170 = scmp.ne.s32.totalorder %s155, %s169
    %p171 = scmp.eq.s32.totalorder %s19, 0
    %p172 = por %p170, %p171
    %s173 = ssub.s32 %s13, %s20
    %p174 = scmp.eq.s32.totalorder %s173, 0
    %s176 = sadd.s32 %s175, 1
    %s177 = scalar_select %p174, %s175, %s176
    %p180 = pneg %p174
    %p181 = scmp.eq.s32.totalorder %s13, 1
    %p182 = por %p180, %p181
    %p183 = scmp.ne.s32.totalorder %s175, %s178
    %p184 = scmp.eq.s32.totalorder %s13, 0
    %p185 = por %p183, %p184
    %p186 = scmp.ne.s32.totalorder %s175, %s178
    %p187 = scmp.eq.s32.totalorder %s18, 1
    %p188 = por %p186, %p187
    %p189 = scmp.ne.s32.totalorder %s178, %s179
    %p190 = scmp.eq.s32.totalorder %s18, 0
    %p191 = por %p189, %p190
    %p192 = scmp.ne.s32.totalorder %s178, %s179
    %p193 = scmp.eq.s32.totalorder %s19, 1
    %p194 = por %p192, %p193
    %p196 = scmp.ne.s32.totalorder %s179, %s195
    %p197 = scmp.eq.s32.totalorder %s19, 0
    %p198 = por %p196, %p197
    %p199 = scmp.le.s32.totalorder 1, %s13
    %p200 = scmp.lt.s32.totalorder %s13, 3
    %p201 = pnand %p199, %p200
    %p202 = pneg %p201
    // Predicated region
    $region9: #{tpu_custom_call.1} parent=5 // pred_check
      _
    $region10: #{tpu_custom_call.1} parent=5 // pred_check_branch
      %204 = sbr.rel (%p201) target = $region12
    $region11: #{tpu_custom_call.1} parent=5 // pred_region
      %s205 = ssub.s32 %s13, 1
      // Predicated region
      $region13: #{tpu_custom_call.1} parent=11 // pred_check
        %p206 = pneg %p60
      $region14: #{tpu_custom_call.1} parent=11 // pred_check_branch
        %208 = sbr.rel (%p206) target = $region16
      $region15: #{tpu_custom_call.1} parent=11 // pred_region
        _
      $region16: #{tpu_custom_call.1} parent=11 // pred_fallthru
        _
      // Predicated region
      $region17: #{tpu_custom_call.1} parent=11 // pred_check
        %p209 = pneg %p81
      $region18: #{tpu_custom_call.1} parent=11 // pred_check_branch
        %211 = sbr.rel (%p209) target = $region20
      $region19: #{tpu_custom_call.1} parent=11 // pred_region
        _
      $region20: #{tpu_custom_call.1} parent=11 // pred_fallthru
        _
      // Predicated region
      $region21: #{tpu_custom_call.1} parent=11 // pred_check
        %p212 = pneg %p102
      $region22: #{tpu_custom_call.1} parent=11 // pred_check_branch
        %214 = sbr.rel (%p212) target = $region24
      $region23: #{tpu_custom_call.1} parent=11 // pred_region
        _
      $region24: #{tpu_custom_call.1} parent=11 // pred_fallthru
        _
      // Predicated region
      $region25: #{tpu_custom_call.1} parent=11 // pred_check
        %p215 = pneg %p123
      $region26: #{tpu_custom_call.1} parent=11 // pred_check_branch
        %217 = sbr.rel (%p215) target = $region28
      $region27: #{tpu_custom_call.1} parent=11 // pred_region
        _
      $region28: #{tpu_custom_call.1} parent=11 // pred_fallthru
        _
      // Predicated region
      $region29: #{tpu_custom_call.1} parent=11 // pred_check
        %p218 = pneg %p144
      $region30: #{tpu_custom_call.1} parent=11 // pred_check_branch
        %220 = sbr.rel (%p218) target = $region32
      $region31: #{tpu_custom_call.1} parent=11 // pred_region
        _
      $region32: #{tpu_custom_call.1} parent=11 // pred_fallthru
        _
      // Predicated region
      $region33: #{tpu_custom_call.1} parent=11 // pred_check
        %p221 = pneg %p165
      $region34: #{tpu_custom_call.1} parent=11 // pred_check_branch
        %223 = sbr.rel (%p221) target = $region36
      $region35: #{tpu_custom_call.1} parent=11 // pred_region
        _
      $region36: #{tpu_custom_call.1} parent=11 // pred_fallthru
        _
    $region12: #{tpu_custom_call.1} parent=5 // pred_fallthru
      _
    %p224 = scmp.lt.s32.totalorder %s13, 2
    // Predicated region
    $region37: #{tpu_custom_call.1} parent=5 // pred_check
      %p225 = pneg %p224
    $region38: #{tpu_custom_call.1} parent=5 // pred_check_branch
      %227 = sbr.rel (%p225) target = $region40
    $region39: #{tpu_custom_call.1} parent=5 // pred_region
      // Predicated region
      $region41: #{tpu_custom_call.1} parent=39 // pred_check
        %p228 = pneg %p33
      $region42: #{tpu_custom_call.1} parent=39 // pred_check_branch
        %230 = sbr.rel (%p228) target = $region44
      $region43: #{tpu_custom_call.1} parent=39 // pred_region
        %s231 = smul.u32 32, %s13
        %p232 = scmp.lt.s32.totalorder %s231, 63
        %s233 = scalar_select %p232, %s231, 63
        %s234 = smul.addr %s233, 8
        %s235 = scalar_lea.vmem %s0, %s234
        %s236 = smul.u32 32, %s13
      $region44: #{tpu_custom_call.1} parent=39 // pred_fallthru
        _
    $region40: #{tpu_custom_call.1} parent=5 // pred_fallthru
      _
    %p237 = scmp.le.s32.totalorder 1, %s13
    %p238 = scmp.lt.s32.totalorder %s13, 3
    %p239 = pnand %p237, %p238
    %p240 = pneg %p239
    // Predicated region
    $region45: #{tpu_custom_call.1} parent=5 // pred_check
      _
    $region46: #{tpu_custom_call.1} parent=5 // pred_check_branch
      %242 = sbr.rel (%p239) target = $region48
    $region47: #{tpu_custom_call.1} parent=5 // pred_region
      %s243 = ssub.s32 %s13, 1
      %s244 = smul.u32 32, %s18
      %p245 = scmp.lt.s32.totalorder %s244, 63
      %s246 = scalar_select %p245, %s244, 63
      %s247 = smul.addr %s246, 8
      %s248 = scalar_lea.vmem %s0, %s247
      %p249 = pneg %p39
      %p250 = pneg %p36
      %p251 = pneg %p60
      %p252 = pneg %p57
      %p253 = pneg %p81
      %p254 = pneg %p78
      %p255 = pneg %p102
      %p256 = pneg %p99
      %p257 = pneg %p123
      %p258 = pneg %p120
      %p259 = pneg %p144
      %p260 = pneg %p141
      %p261 = pneg %p165
      %p262 = pneg %p162
      %p263 = pneg %p191
      %p264 = pneg %p188
      %s265 = smul.u32 32, %s18
      %p266 = scmp.lt.s32.totalorder %s265, 63
      %s267 = scalar_select %p266, %s265, 63
      %s268 = smul.addr %s267, 8
      %s269 = scalar_lea.vmem %s7, %s268
      %s270 = smul.u32 32, %s18
      %p271 = scmp.lt.s32.totalorder %s270, 63
      %s272 = scalar_select %p271, %s270, 63
      %s273 = smul.addr %s272, 8
      %s274 = scalar_lea.vmem %s0, %s273
      %s275 = smul.u32 32, %s18
      %s276 = smul.u32 32, %s18
      %p277 = scmp.lt.s32.totalorder %s276, 63
      %s278 = scalar_select %p277, %s276, 63
      %s279 = smul.addr %s278, 8
      %s280 = scalar_lea.vmem %s7, %s279
      %s281 = smul.u32 32, %s18
      %v283 = vld [vmem:[%s274] sm:$0xff]
      %v284 = vld [vmem:[%s274 + $0x8] sm:$0xff]
      %v285 = vld [vmem:[%s274 + $0x10] sm:$0xff]
      %v286 = vld [vmem:[%s274 + $0x18] sm:$0xff]
      %v287 = vld [vmem:[%s274 + $0x20] sm:$0xff]
      %v288 = vld [vmem:[%s274 + $0x28] sm:$0xff]
      %v289 = vld [vmem:[%s274 + $0x30] sm:$0xff]
      %v290 = vld [vmem:[%s274 + $0x38] sm:$0xff]
      %v291 = vld [vmem:[%s274 + $0x40] sm:$0xff]
      %v292 = vld [vmem:[%s274 + $0x48] sm:$0xff]
      %v293 = vld [vmem:[%s274 + $0x50] sm:$0xff]
      %v294 = vld [vmem:[%s274 + $0x58] sm:$0xff]
      %v295 = vld [vmem:[%s274 + $0x60] sm:$0xff]
      %v296 = vld [vmem:[%s274 + $0x68] sm:$0xff]
      %v297 = vld [vmem:[%s274 + $0x70] sm:$0xff]
      %v298 = vld [vmem:[%s274 + $0x78] sm:$0xff]
      %v299 = vld [vmem:[%s274 + $0x80] sm:$0xff]
      %v300 = vld [vmem:[%s274 + $0x88] sm:$0xff]
      %v301 = vld [vmem:[%s274 + $0x90] sm:$0xff]
      %v302 = vld [vmem:[%s274 + $0x98] sm:$0xff]
      %v303 = vld [vmem:[%s274 + $0xa0] sm:$0xff]
      %v304 = vld [vmem:[%s274 + $0xa8] sm:$0xff]
      %v305 = vld [vmem:[%s274 + $0xb0] sm:$0xff]
      %v306 = vld [vmem:[%s274 + $0xb8] sm:$0xff]
      %v307 = vld [vmem:[%s274 + $0xc0] sm:$0xff]
      %v308 = vld [vmem:[%s274 + $0xc8] sm:$0xff]
      %v309 = vld [vmem:[%s274 + $0xd0] sm:$0xff]
      %v310 = vld [vmem:[%s274 + $0xd8] sm:$0xff]
      %v311 = vld [vmem:[%s274 + $0xe0] sm:$0xff]
      %v312 = vld [vmem:[%s274 + $0xe8] sm:$0xff]
      %v313 = vld [vmem:[%s274 + $0xf0] sm:$0xff]
      %v314 = vld [vmem:[%s274 + $0xf8] sm:$0xff]
      %v315 = vpack.c.bf16 %v284, %v283
      %v316 = vpack.c.bf16 %v286, %v285
      %v317 = vpack.c.bf16 %v288, %v287
      %v318 = vpack.c.bf16 %v290, %v289
      %v319 = vpack.c.bf16 %v292, %v291
      %v320 = vpack.c.bf16 %v294, %v293
      %v321 = vpack.c.bf16 %v296, %v295
      %v322 = vpack.c.bf16 %v298, %v297
      %v323 = vpack.c.bf16 %v300, %v299
      %v324 = vpack.c.bf16 %v302, %v301
      %v325 = vpack.c.bf16 %v304, %v303
      %v326 = vpack.c.bf16 %v306, %v305
      %v327 = vpack.c.bf16 %v308, %v307
      %v328 = vpack.c.bf16 %v310, %v309
      %v329 = vpack.c.bf16 %v312, %v311
      %v330 = vpack.c.bf16 %v314, %v313
      %v331 = vld [vmem:[%s1] sm:$0xf]
      %v332 = vld [vmem:[%s1 + $0x4] sm:$0xf]
      %v333 = vld [vmem:[%s2] sm:$0x1]
      %v335 = vlaneseq
      %v336 = vshrl.u32 %v335, 7
      %v337 = vsub.s32 0, %v336
      %v338 = vrot.slane %v333, %v337
      %v342 = vunpack.c.l.b16 %v331
      %v343 = vunpack.c.l.b16 %v332
      %v344 = vpack.c.b16 %v343, %v342
      %vm346 = vcmask 130048
      %v348 = vsel %vm346, %v315, 0
      %v351 = vsel %vm346, %v316, 0
      %v354 = vsel %vm346, %v317, 0
      %v357 = vsel %vm346, %v318, 0
      %v360 = vsel %vm346, %v319, 0
      %v363 = vsel %vm346, %v320, 0
      %v366 = vsel %vm346, %v321, 0
      %v369 = vsel %vm346, %v322, 0
      %v372 = vsel %vm346, %v323, 0
      %v375 = vsel %vm346, %v324, 0
      %v378 = vsel %vm346, %v325, 0
      %v381 = vsel %vm346, %v326, 0
      %v384 = vsel %vm346, %v327, 0
      %v387 = vsel %vm346, %v328, 0
      %v390 = vsel %vm346, %v329, 0
      %v393 = vsel %vm346, %v330, 0
      %395 = vmatprep.subr.bf16.mxu0 0
      %396 = vmatpush1.bf16.msra.mxu0 0
      %397 = vmatprep.subr.bf16.mxu0 0
      %398 = vmatpush1.bf16.msra.mxu0 0
      %399 = vmatprep.subr.bf16.mxu0 0
      %400 = vmatpush1.bf16.msra.mxu0 0
      %401 = vmatprep.subr.bf16.mxu0 0
      %402 = vmatpush1.bf16.msra.mxu0 0
      %403 = vmatprep.subr.bf16.mxu0 0
      %404 = vmatpush1.bf16.msra.mxu0 0
      %405 = vmatprep.subr.bf16.mxu0 0
      %406 = vmatpush1.bf16.msra.mxu0 0
      %407 = vmatprep.subr.bf16.mxu0 0
      %408 = vmatpush1.bf16.msra.mxu0 0
      %409 = vmatprep.subr.bf16.mxu0 0
      %410 = vmatpush1.bf16.msra.mxu0 %v344
      %411 = vmatprep.subr.bf16.mxu0 0
      %412 = vmatpush2.bf16.msra.mxu0 0
      %413 = vmatprep.subr.bf16.mxu0 0
      %414 = vmatpush2.bf16.msra.mxu0 0
      %415 = vmatprep.subr.bf16.mxu0 0
      %416 = vmatpush2.bf16.msra.mxu0 0
      %417 = vmatprep.subr.bf16.mxu0 0
      %418 = vmatpush2.bf16.msra.mxu0 0
      %419 = vmatprep.subr.bf16.mxu0 0
      %420 = vmatpush2.bf16.msra.mxu0 0
      %421 = vmatprep.subr.bf16.mxu0 0
      %422 = vmatpush2.bf16.msra.mxu0 0
      %423 = vmatprep.subr.bf16.mxu0 0
      %424 = vmatpush2.bf16.msra.mxu0 0
      %425 = vmatprep.subr.bf16.mxu0 0
      %426 = vmatpush2.bf16.msra.mxu0 0
      %427 = vmatprep.mubr.bf16.mxu0 0
      %428 = vmatmul.mubr.bf16.gmra.mxu0 %v348
      %v429 = vpop.f32.mrf.mxu0
      %v430 = vadd.f32 %v338, %v429
      %v431 = vpop.f32.mrf.mxu0
      %v432 = vpop.f32.mrf.mxu0
      %v433 = vadd.f32 %v338, %v432
      %v434 = vpop.f32.mrf.mxu0
      %435 = vmatprep.mubr.bf16.mxu0 0
      %436 = vmatmul.mubr.bf16.gmra.mxu0 %v351
      %v437 = vpop.f32.mrf.mxu0
      %v438 = vadd.f32 %v338, %v437
      %v439 = vpop.f32.mrf.mxu0
      %v440 = vpop.f32.mrf.mxu0
      %v441 = vadd.f32 %v338, %v440
      %v442 = vpop.f32.mrf.mxu0
      %443 = vmatprep.mubr.bf16.mxu0 0
      %444 = vmatmul.mubr.bf16.gmra.mxu0 %v354
      %v445 = vpop.f32.mrf.mxu0
      %v446 = vadd.f32 %v338, %v445
      %v447 = vpop.f32.mrf.mxu0
      %v448 = vpop.f32.mrf.mxu0
      %v449 = vadd.f32 %v338, %v448
      %v450 = vpop.f32.mrf.mxu0
      %451 = vmatprep.mubr.bf16.mxu0 0
      %452 = vmatmul.mubr.bf16.gmra.mxu0 %v357
      %v453 = vpop.f32.mrf.mxu0
      %v454 = vadd.f32 %v338, %v453
      %v455 = vpop.f32.mrf.mxu0
      %v456 = vpop.f32.mrf.mxu0
      %v457 = vadd.f32 %v338, %v456
      %v458 = vpop.f32.mrf.mxu0
      %459 = vmatprep.mubr.bf16.mxu0 0
      %460 = vmatmul.mubr.bf16.gmra.mxu0 %v360
      %v461 = vpop.f32.mrf.mxu0
      %v462 = vadd.f32 %v338, %v461
      %v463 = vpop.f32.mrf.mxu0
      %v464 = vpop.f32.mrf.mxu0
      %v465 = vadd.f32 %v338, %v464
      %v466 = vpop.f32.mrf.mxu0
      %467 = vmatprep.mubr.bf16.mxu0 0
      %468 = vmatmul.mubr.bf16.gmra.mxu0 %v363
      %v469 = vpop.f32.mrf.mxu0
      %v470 = vadd.f32 %v338, %v469
      %v471 = vpop.f32.mrf.mxu0
      %v472 = vpop.f32.mrf.mxu0
      %v473 = vadd.f32 %v338, %v472
      %v474 = vpop.f32.mrf.mxu0
      %475 = vmatprep.mubr.bf16.mxu0 0
      %476 = vmatmul.mubr.bf16.gmra.mxu0 %v366
      %v477 = vpop.f32.mrf.mxu0
      %v478 = vadd.f32 %v338, %v477
      %v479 = vpop.f32.mrf.mxu0
      %v480 = vpop.f32.mrf.mxu0
      %v481 = vadd.f32 %v338, %v480
      %v482 = vpop.f32.mrf.mxu0
      %483 = vmatprep.mubr.bf16.mxu0 0
      %484 = vmatmul.mubr.bf16.gmra.mxu0 %v369
      %v485 = vpop.f32.mrf.mxu0
      %v486 = vadd.f32 %v338, %v485
      %v487 = vpop.f32.mrf.mxu0
      %v488 = vpop.f32.mrf.mxu0
      %v489 = vadd.f32 %v338, %v488
      %v490 = vpop.f32.mrf.mxu0
      %491 = vmatprep.mubr.bf16.mxu0 0
      %492 = vmatmul.mubr.bf16.gmra.mxu0 %v372
      %v493 = vpop.f32.mrf.mxu0
      %v494 = vadd.f32 %v338, %v493
      %v495 = vpop.f32.mrf.mxu0
      %v496 = vpop.f32.mrf.mxu0
      %v497 = vadd.f32 %v338, %v496
      %v498 = vpop.f32.mrf.mxu0
      %499 = vmatprep.mubr.bf16.mxu0 0
      %500 = vmatmul.mubr.bf16.gmra.mxu0 %v375
      %v501 = vpop.f32.mrf.mxu0
      %v502 = vadd.f32 %v338, %v501
      %v503 = vpop.f32.mrf.mxu0
      %v504 = vpop.f32.mrf.mxu0
      %v505 = vadd.f32 %v338, %v504
      %v506 = vpop.f32.mrf.mxu0
      %507 = vmatprep.mubr.bf16.mxu0 0
      %508 = vmatmul.mubr.bf16.gmra.mxu0 %v378
      %v509 = vpop.f32.mrf.mxu0
      %v510 = vadd.f32 %v338, %v509
      %v511 = vpop.f32.mrf.mxu0
      %v512 = vpop.f32.mrf.mxu0
      %v513 = vadd.f32 %v338, %v512
      %v514 = vpop.f32.mrf.mxu0
      %515 = vmatprep.mubr.bf16.mxu0 0
      %516 = vmatmul.mubr.bf16.gmra.mxu0 %v381
      %v517 = vpop.f32.mrf.mxu0
      %v518 = vadd.f32 %v338, %v517
      %v519 = vpop.f32.mrf.mxu0
      %v520 = vpop.f32.mrf.mxu0
      %v521 = vadd.f32 %v338, %v520
      %v522 = vpop.f32.mrf.mxu0
      %523 = vmatprep.mubr.bf16.mxu0 0
      %524 = vmatmul.mubr.bf16.gmra.mxu0 %v384
      %v525 = vpop.f32.mrf.mxu0
      %v526 = vadd.f32 %v338, %v525
      %v527 = vpop.f32.mrf.mxu0
      %v528 = vpop.f32.mrf.mxu0
      %v529 = vadd.f32 %v338, %v528
      %v530 = vpop.f32.mrf.mxu0
      %531 = vmatprep.mubr.bf16.mxu0 0
      %532 = vmatmul.mubr.bf16.gmra.mxu0 %v387
      %v533 = vpop.f32.mrf.mxu0
      %v534 = vadd.f32 %v338, %v533
      %v535 = vpop.f32.mrf.mxu0
      %v536 = vpop.f32.mrf.mxu0
      %v537 = vadd.f32 %v338, %v536
      %v538 = vpop.f32.mrf.mxu0
      %539 = vmatprep.mubr.bf16.mxu0 0
      %540 = vmatmul.mubr.bf16.gmra.mxu0 %v390
      %v541 = vpop.f32.mrf.mxu0
      %v542 = vadd.f32 %v338, %v541
      %v543 = vpop.f32.mrf.mxu0
      %v544 = vpop.f32.mrf.mxu0
      %v545 = vadd.f32 %v338, %v544
      %v546 = vpop.f32.mrf.mxu0
      %547 = vmatprep.mubr.bf16.mxu0 0
      %548 = vmatmul.mubr.bf16.gmra.mxu0 %v393
      %v549 = vpop.f32.mrf.mxu0
      %v550 = vadd.f32 %v338, %v549
      %v551 = vpop.f32.mrf.mxu0
      %v552 = vpop.f32.mrf.mxu0
      %v553 = vadd.f32 %v338, %v552
      %v554 = vpop.f32.mrf.mxu0
      %555 = vdwg.mxu0
      %v556 = vmax.f32 %v430, 0.0
      %v557 = vmax.f32 %v433, 0.0
      %v558 = vmax.f32 %v438, 0.0
      %v559 = vmax.f32 %v441, 0.0
      %v560 = vmax.f32 %v446, 0.0
      %v561 = vmax.f32 %v449, 0.0
      %v562 = vmax.f32 %v454, 0.0
      %v563 = vmax.f32 %v457, 0.0
      %v564 = vmax.f32 %v462, 0.0
      %v565 = vmax.f32 %v465, 0.0
      %v566 = vmax.f32 %v470, 0.0
      %v567 = vmax.f32 %v473, 0.0
      %v568 = vmax.f32 %v478, 0.0
      %v569 = vmax.f32 %v481, 0.0
      %v570 = vmax.f32 %v486, 0.0
      %v571 = vmax.f32 %v489, 0.0
      %v572 = vmax.f32 %v494, 0.0
      %v573 = vmax.f32 %v497, 0.0
      %v574 = vmax.f32 %v502, 0.0
      %v575 = vmax.f32 %v505, 0.0
      %v576 = vmax.f32 %v510, 0.0
      %v577 = vmax.f32 %v513, 0.0
      %v578 = vmax.f32 %v518, 0.0
      %v579 = vmax.f32 %v521, 0.0
      %v580 = vmax.f32 %v526, 0.0
      %v581 = vmax.f32 %v529, 0.0
      %v582 = vmax.f32 %v534, 0.0
      %v583 = vmax.f32 %v537, 0.0
      %v584 = vmax.f32 %v542, 0.0
      %v585 = vmax.f32 %v545, 0.0
      %v586 = vmax.f32 %v550, 0.0
      %v587 = vmax.f32 %v553, 0.0
      %v588 = vpack.c.bf16 %v557, %v556
      %v589 = vpack.c.bf16 %v559, %v558
      %v590 = vpack.c.bf16 %v561, %v560
      %v591 = vpack.c.bf16 %v563, %v562
      %v592 = vpack.c.bf16 %v565, %v564
      %v593 = vpack.c.bf16 %v567, %v566
      %v594 = vpack.c.bf16 %v569, %v568
      %v595 = vpack.c.bf16 %v571, %v570
      %v596 = vpack.c.bf16 %v573, %v572
      %v597 = vpack.c.bf16 %v575, %v574
      %v598 = vpack.c.bf16 %v577, %v576
      %v599 = vpack.c.bf16 %v579, %v578
      %v600 = vpack.c.bf16 %v581, %v580
      %v601 = vpack.c.bf16 %v583, %v582
      %v602 = vpack.c.bf16 %v585, %v584
      %v603 = vpack.c.bf16 %v587, %v586
      %v604 = vld [vmem:[%s3] sm:$0xf]
      %v605 = vld [vmem:[%s3 + $0x4] sm:$0xf]
      %v606 = vld [vmem:[%s3 + $0x8] sm:$0xf]
      %v607 = vld [vmem:[%s3 + $0xc] sm:$0xf]
      %v608 = vld [vmem:[%s3 + $0x10] sm:$0xf]
      %v609 = vld [vmem:[%s3 + $0x14] sm:$0xf]
      %v610 = vld [vmem:[%s3 + $0x18] sm:$0xf]
      %v611 = vld [vmem:[%s3 + $0x1c] sm:$0xf]
      %v612 = vld [vmem:[%s3 + $0x20] sm:$0xf]
      %v613 = vld [vmem:[%s3 + $0x24] sm:$0xf]
      %v614 = vld [vmem:[%s3 + $0x28] sm:$0xf]
      %v615 = vld [vmem:[%s3 + $0x2c] sm:$0xf]
      %v616 = vld [vmem:[%s3 + $0x30] sm:$0xf]
      %v617 = vld [vmem:[%s3 + $0x34] sm:$0xf]
      %v618 = vld [vmem:[%s3 + $0x38] sm:$0xf]
      %v619 = vld [vmem:[%s3 + $0x3c] sm:$0xf]
      %v620 = vld [vmem:[%s4] sm:$0x1]
      %v622 = vlaneseq
      %v623 = vshrl.u32 %v622, 7
      %v624 = vsub.s32 0, %v623
      %v625 = vrot.slane %v620, %v624
      %v643 = vunpack.c.l.b16 %v604
      %v644 = vunpack.c.l.b16 %v605
      %v645 = vunpack.c.l.b16 %v606
      %v646 = vunpack.c.l.b16 %v607
      %v647 = vunpack.c.l.b16 %v608
      %v648 = vunpack.c.l.b16 %v609
      %v649 = vunpack.c.l.b16 %v610
      %v650 = vunpack.c.l.b16 %v611
      %v651 = vunpack.c.l.b16 %v612
      %v652 = vunpack.c.l.b16 %v613
      %v653 = vunpack.c.l.b16 %v614
      %v654 = vunpack.c.l.b16 %v615
      %v655 = vunpack.c.l.b16 %v616
      %v656 = vunpack.c.l.b16 %v617
      %v657 = vunpack.c.l.b16 %v618
      %v658 = vunpack.c.l.b16 %v619
      %v659 = vpack.c.b16 %v644, %v643
      %v660 = vpack.c.b16 %v646, %v645
      %v661 = vpack.c.b16 %v648, %v647
      %v662 = vpack.c.b16 %v650, %v649
      %v663 = vpack.c.b16 %v652, %v651
      %v664 = vpack.c.b16 %v654, %v653
      %v665 = vpack.c.b16 %v656, %v655
      %v666 = vpack.c.b16 %v658, %v657
      %675 = vmatprep.subr.bf16.mxu0 0
      %676 = vmatpush1.bf16.msra.mxu0 %v666
      %677 = vmatprep.subr.bf16.mxu0 0
      %678 = vmatpush1.bf16.msra.mxu0 %v665
      %679 = vmatprep.subr.bf16.mxu0 0
      %680 = vmatpush1.bf16.msra.mxu0 %v664
      %681 = vmatprep.subr.bf16.mxu0 0
      %682 = vmatpush1.bf16.msra.mxu0 %v663
      %683 = vmatprep.subr.bf16.mxu0 0
      %684 = vmatpush1.bf16.msra.mxu0 %v662
      %685 = vmatprep.subr.bf16.mxu0 0
      %686 = vmatpush1.bf16.msra.mxu0 %v661
      %687 = vmatprep.subr.bf16.mxu0 0
      %688 = vmatpush1.bf16.msra.mxu0 %v660
      %689 = vmatprep.subr.bf16.mxu0 0
      %690 = vmatpush1.bf16.msra.mxu0 %v659
      %691 = vmatprep.subr.bf16.mxu0 0
      %692 = vmatpush2.bf16.msra.mxu0 0
      %693 = vmatprep.subr.bf16.mxu0 0
      %694 = vmatpush2.bf16.msra.mxu0 0
      %695 = vmatprep.subr.bf16.mxu0 0
      %696 = vmatpush2.bf16.msra.mxu0 0
      %697 = vmatprep.subr.bf16.mxu0 0
      %698 = vmatpush2.bf16.msra.mxu0 0
      %699 = vmatprep.subr.bf16.mxu0 0
      %700 = vmatpush2.bf16.msra.mxu0 0
      %701 = vmatprep.subr.bf16.mxu0 0
      %702 = vmatpush2.bf16.msra.mxu0 0
      %703 = vmatprep.subr.bf16.mxu0 0
      %704 = vmatpush2.bf16.msra.mxu0 0
      %705 = vmatprep.subr.bf16.mxu0 0
      %706 = vmatpush2.bf16.msra.mxu0 0
      %707 = vmatprep.mubr.bf16.mxu0 0
      %708 = vmatmul.mubr.bf16.gmra.mxu0 %v588
      %v709 = vpop.f32.mrf.mxu0
      %v710 = vadd.f32 %v625, %v709
      %v711 = vpop.f32.mrf.mxu0
      %v712 = vpop.f32.mrf.mxu0
      %v713 = vadd.f32 %v625, %v712
      %v714 = vpop.f32.mrf.mxu0
      %715 = vmatprep.mubr.bf16.mxu0 0
      %716 = vmatmul.mubr.bf16.gmra.mxu0 %v589
      %v717 = vpop.f32.mrf.mxu0
      %v718 = vadd.f32 %v625, %v717
      %v719 = vpop.f32.mrf.mxu0
      %v720 = vpop.f32.mrf.mxu0
      %v721 = vadd.f32 %v625, %v720
      %v722 = vpop.f32.mrf.mxu0
      %723 = vmatprep.mubr.bf16.mxu0 0
      %724 = vmatmul.mubr.bf16.gmra.mxu0 %v590
      %v725 = vpop.f32.mrf.mxu0
      %v726 = vadd.f32 %v625, %v725
      %v727 = vpop.f32.mrf.mxu0
      %v728 = vpop.f32.mrf.mxu0
      %v729 = vadd.f32 %v625, %v728
      %v730 = vpop.f32.mrf.mxu0
      %731 = vmatprep.mubr.bf16.mxu0 0
      %732 = vmatmul.mubr.bf16.gmra.mxu0 %v591
      %v733 = vpop.f32.mrf.mxu0
      %v734 = vadd.f32 %v625, %v733
      %v735 = vpop.f32.mrf.mxu0
      %v736 = vpop.f32.mrf.mxu0
      %v737 = vadd.f32 %v625, %v736
      %v738 = vpop.f32.mrf.mxu0
      %739 = vmatprep.mubr.bf16.mxu0 0
      %740 = vmatmul.mubr.bf16.gmra.mxu0 %v592
      %v741 = vpop.f32.mrf.mxu0
      %v742 = vadd.f32 %v625, %v741
      %v743 = vpop.f32.mrf.mxu0
      %v744 = vpop.f32.mrf.mxu0
      %v745 = vadd.f32 %v625, %v744
      %v746 = vpop.f32.mrf.mxu0
      %747 = vmatprep.mubr.bf16.mxu0 0
      %748 = vmatmul.mubr.bf16.gmra.mxu0 %v593
      %v749 = vpop.f32.mrf.mxu0
      %v750 = vadd.f32 %v625, %v749
      %v751 = vpop.f32.mrf.mxu0
      %v752 = vpop.f32.mrf.mxu0
      %v753 = vadd.f32 %v625, %v752
      %v754 = vpop.f32.mrf.mxu0
      %755 = vmatprep.mubr.bf16.mxu0 0
      %756 = vmatmul.mubr.bf16.gmra.mxu0 %v594
      %v757 = vpop.f32.mrf.mxu0
      %v758 = vadd.f32 %v625, %v757
      %v759 = vpop.f32.mrf.mxu0
      %v760 = vpop.f32.mrf.mxu0
      %v761 = vadd.f32 %v625, %v760
      %v762 = vpop.f32.mrf.mxu0
      %763 = vmatprep.mubr.bf16.mxu0 0
      %764 = vmatmul.mubr.bf16.gmra.mxu0 %v595
      %v765 = vpop.f32.mrf.mxu0
      %v766 = vadd.f32 %v625, %v765
      %v767 = vpop.f32.mrf.mxu0
      %v768 = vpop.f32.mrf.mxu0
      %v769 = vadd.f32 %v625, %v768
      %v770 = vpop.f32.mrf.mxu0
      %771 = vmatprep.mubr.bf16.mxu0 0
      %772 = vmatmul.mubr.bf16.gmra.mxu0 %v596
      %v773 = vpop.f32.mrf.mxu0
      %v774 = vadd.f32 %v625, %v773
      %v775 = vpop.f32.mrf.mxu0
      %v776 = vpop.f32.mrf.mxu0
      %v777 = vadd.f32 %v625, %v776
      %v778 = vpop.f32.mrf.mxu0
      %779 = vmatprep.mubr.bf16.mxu0 0
      %780 = vmatmul.mubr.bf16.gmra.mxu0 %v597
      %v781 = vpop.f32.mrf.mxu0
      %v782 = vadd.f32 %v625, %v781
      %v783 = vpop.f32.mrf.mxu0
      %v784 = vpop.f32.mrf.mxu0
      %v785 = vadd.f32 %v625, %v784
      %v786 = vpop.f32.mrf.mxu0
      %787 = vmatprep.mubr.bf16.mxu0 0
      %788 = vmatmul.mubr.bf16.gmra.mxu0 %v598
      %v789 = vpop.f32.mrf.mxu0
      %v790 = vadd.f32 %v625, %v789
      %v791 = vpop.f32.mrf.mxu0
      %v792 = vpop.f32.mrf.mxu0
      %v793 = vadd.f32 %v625, %v792
      %v794 = vpop.f32.mrf.mxu0
      %795 = vmatprep.mubr.bf16.mxu0 0
      %796 = vmatmul.mubr.bf16.gmra.mxu0 %v599
      %v797 = vpop.f32.mrf.mxu0
      %v798 = vadd.f32 %v625, %v797
      %v799 = vpop.f32.mrf.mxu0
      %v800 = vpop.f32.mrf.mxu0
      %v801 = vadd.f32 %v625, %v800
      %v802 = vpop.f32.mrf.mxu0
      %803 = vmatprep.mubr.bf16.mxu0 0
      %804 = vmatmul.mubr.bf16.gmra.mxu0 %v600
      %v805 = vpop.f32.mrf.mxu0
      %v806 = vadd.f32 %v625, %v805
      %v807 = vpop.f32.mrf.mxu0
      %v808 = vpop.f32.mrf.mxu0
      %v809 = vadd.f32 %v625, %v808
      %v810 = vpop.f32.mrf.mxu0
      %811 = vmatprep.mubr.bf16.mxu0 0
      %812 = vmatmul.mubr.bf16.gmra.mxu0 %v601
      %v813 = vpop.f32.mrf.mxu0
      %v814 = vadd.f32 %v625, %v813
      %v815 = vpop.f32.mrf.mxu0
      %v816 = vpop.f32.mrf.mxu0
      %v817 = vadd.f32 %v625, %v816
      %v818 = vpop.f32.mrf.mxu0
      %819 = vmatprep.mubr.bf16.mxu0 0
      %820 = vmatmul.mubr.bf16.gmra.mxu0 %v602
      %v821 = vpop.f32.mrf.mxu0
      %v822 = vadd.f32 %v625, %v821
      %v823 = vpop.f32.mrf.mxu0
      %v824 = vpop.f32.mrf.mxu0
      %v825 = vadd.f32 %v625, %v824
      %v826 = vpop.f32.mrf.mxu0
      %827 = vmatprep.mubr.bf16.mxu0 0
      %828 = vmatmul.mubr.bf16.gmra.mxu0 %v603
      %v829 = vpop.f32.mrf.mxu0
      %v830 = vadd.f32 %v625, %v829
      %v831 = vpop.f32.mrf.mxu0
      %v832 = vpop.f32.mrf.mxu0
      %v833 = vadd.f32 %v625, %v832
      %v834 = vpop.f32.mrf.mxu0
      %835 = vdwg.mxu0
      %v836 = vxor.u32 %v710, 2147483648
      %v837 = vxor.u32 %v713, 2147483648
      %v838 = vxor.u32 %v718, 2147483648
      %v839 = vxor.u32 %v721, 2147483648
      %v840 = vxor.u32 %v726, 2147483648
      %v841 = vxor.u32 %v729, 2147483648
      %v842 = vxor.u32 %v734, 2147483648
      %v843 = vxor.u32 %v737, 2147483648
      %v844 = vxor.u32 %v742, 2147483648
      %v845 = vxor.u32 %v745, 2147483648
      %v846 = vxor.u32 %v750, 2147483648
      %v847 = vxor.u32 %v753, 2147483648
      %v848 = vxor.u32 %v758, 2147483648
      %v849 = vxor.u32 %v761, 2147483648
      %v850 = vxor.u32 %v766, 2147483648
      %v851 = vxor.u32 %v769, 2147483648
      %v852 = vxor.u32 %v774, 2147483648
      %v853 = vxor.u32 %v777, 2147483648
      %v854 = vxor.u32 %v782, 2147483648
      %v855 = vxor.u32 %v785, 2147483648
      %v856 = vxor.u32 %v790, 2147483648
      %v857 = vxor.u32 %v793, 2147483648
      %v858 = vxor.u32 %v798, 2147483648
      %v859 = vxor.u32 %v801, 2147483648
      %v860 = vxor.u32 %v806, 2147483648
      %v861 = vxor.u32 %v809, 2147483648
      %v862 = vxor.u32 %v814, 2147483648
      %v863 = vxor.u32 %v817, 2147483648
      %v864 = vxor.u32 %v822, 2147483648
      %v865 = vxor.u32 %v825, 2147483648
      %v866 = vxor.u32 %v830, 2147483648
      %v867 = vxor.u32 %v833, 2147483648
      %v868 = vmul.f32 %v836, 1.442695
      %v869 = vpow.pop %v868
      %v870 = vmul.f32 %v837, 1.442695
      %v871 = vpow.pop %v870
      %v872 = vmul.f32 %v838, 1.442695
      %v873 = vpow.pop %v872
      %v874 = vmul.f32 %v839, 1.442695
      %v875 = vpow.pop %v874
      %v876 = vmul.f32 %v840, 1.442695
      %v877 = vpow.pop %v876
      %v878 = vmul.f32 %v841, 1.442695
      %v879 = vpow.pop %v878
      %v880 = vmul.f32 %v842, 1.442695
      %v881 = vpow.pop %v880
      %v882 = vmul.f32 %v843, 1.442695
      %v883 = vpow.pop %v882
      %v884 = vmul.f32 %v844, 1.442695
      %v885 = vpow.pop %v884
      %v886 = vmul.f32 %v845, 1.442695
      %v887 = vpow.pop %v886
      %v888 = vmul.f32 %v846, 1.442695
      %v889 = vpow.pop %v888
      %v890 = vmul.f32 %v847, 1.442695
      %v891 = vpow.pop %v890
      %v892 = vmul.f32 %v848, 1.442695
      %v893 = vpow.pop %v892
      %v894 = vmul.f32 %v849, 1.442695
      %v895 = vpow.pop %v894
      %v896 = vmul.f32 %v850, 1.442695
      %v897 = vpow.pop %v896
      %v898 = vmul.f32 %v851, 1.442695
      %v899 = vpow.pop %v898
      %v900 = vmul.f32 %v852, 1.442695
      %v901 = vpow.pop %v900
      %v902 = vmul.f32 %v853, 1.442695
      %v903 = vpow.pop %v902
      %v904 = vmul.f32 %v854, 1.442695
      %v905 = vpow.pop %v904
      %v906 = vmul.f32 %v855, 1.442695
      %v907 = vpow.pop %v906
      %v908 = vmul.f32 %v856, 1.442695
      %v909 = vpow.pop %v908
      %v910 = vmul.f32 %v857, 1.442695
      %v911 = vpow.pop %v910
      %v912 = vmul.f32 %v858, 1.442695
      %v913 = vpow.pop %v912
      %v914 = vmul.f32 %v859, 1.442695
      %v915 = vpow.pop %v914
      %v916 = vmul.f32 %v860, 1.442695
      %v917 = vpow.pop %v916
      %v918 = vmul.f32 %v861, 1.442695
      %v919 = vpow.pop %v918
      %v920 = vmul.f32 %v862, 1.442695
      %v921 = vpow.pop %v920
      %v922 = vmul.f32 %v863, 1.442695
      %v923 = vpow.pop %v922
      %v924 = vmul.f32 %v864, 1.442695
      %v925 = vpow.pop %v924
      %v926 = vmul.f32 %v865, 1.442695
      %v927 = vpow.pop %v926
      %v928 = vmul.f32 %v866, 1.442695
      %v929 = vpow.pop %v928
      %v930 = vmul.f32 %v867, 1.442695
      %v931 = vpow.pop %v930
      %v932 = vadd.f32 %v869, 1.0
      %v933 = vadd.f32 %v871, 1.0
      %v934 = vadd.f32 %v873, 1.0
      %v935 = vadd.f32 %v875, 1.0
      %v936 = vadd.f32 %v877, 1.0
      %v937 = vadd.f32 %v879, 1.0
      %v938 = vadd.f32 %v881, 1.0
      %v939 = vadd.f32 %v883, 1.0
      %v940 = vadd.f32 %v885, 1.0
      %v941 = vadd.f32 %v887, 1.0
      %v942 = vadd.f32 %v889, 1.0
      %v943 = vadd.f32 %v891, 1.0
      %v944 = vadd.f32 %v893, 1.0
      %v945 = vadd.f32 %v895, 1.0
      %v946 = vadd.f32 %v897, 1.0
      %v947 = vadd.f32 %v899, 1.0
      %v948 = vadd.f32 %v901, 1.0
      %v949 = vadd.f32 %v903, 1.0
      %v950 = vadd.f32 %v905, 1.0
      %v951 = vadd.f32 %v907, 1.0
      %v952 = vadd.f32 %v909, 1.0
      %v953 = vadd.f32 %v911, 1.0
      %v954 = vadd.f32 %v913, 1.0
      %v955 = vadd.f32 %v915, 1.0
      %v956 = vadd.f32 %v917, 1.0
      %v957 = vadd.f32 %v919, 1.0
      %v958 = vadd.f32 %v921, 1.0
      %v959 = vadd.f32 %v923, 1.0
      %v960 = vadd.f32 %v925, 1.0
      %v961 = vadd.f32 %v927, 1.0
      %v962 = vadd.f32 %v929, 1.0
      %v963 = vadd.f32 %v931, 1.0
      %v964 = vrcp.pop %v932
      %v965 = vmul.f32 1.0, %v964
      %v966 = vrcp.pop %v933
      %v967 = vmul.f32 1.0, %v966
      %v968 = vrcp.pop %v934
      %v969 = vmul.f32 1.0, %v968
      %v970 = vrcp.pop %v935
      %v971 = vmul.f32 1.0, %v970
      %v972 = vrcp.pop %v936
      %v973 = vmul.f32 1.0, %v972
      %v974 = vrcp.pop %v937
      %v975 = vmul.f32 1.0, %v974
      %v976 = vrcp.pop %v938
      %v977 = vmul.f32 1.0, %v976
      %v978 = vrcp.pop %v939
      %v979 = vmul.f32 1.0, %v978
      %v980 = vrcp.pop %v940
      %v981 = vmul.f32 1.0, %v980
      %v982 = vrcp.pop %v941
      %v983 = vmul.f32 1.0, %v982
      %v984 = vrcp.pop %v942
      %v985 = vmul.f32 1.0, %v984
      %v986 = vrcp.pop %v943
      %v987 = vmul.f32 1.0, %v986
      %v988 = vrcp.pop %v944
      %v989 = vmul.f32 1.0, %v988
      %v990 = vrcp.pop %v945
      %v991 = vmul.f32 1.0, %v990
      %v992 = vrcp.pop %v946
      %v993 = vmul.f32 1.0, %v992
      %v994 = vrcp.pop %v947
      %v995 = vmul.f32 1.0, %v994
      %v996 = vrcp.pop %v948
      %v997 = vmul.f32 1.0, %v996
      %v998 = vrcp.pop %v949
      %v999 = vmul.f32 1.0, %v998
      %v1000 = vrcp.pop %v950
      %v1001 = vmul.f32 1.0, %v1000
      %v1002 = vrcp.pop %v951
      %v1003 = vmul.f32 1.0, %v1002
      %v1004 = vrcp.pop %v952
      %v1005 = vmul.f32 1.0, %v1004
      %v1006 = vrcp.pop %v953
      %v1007 = vmul.f32 1.0, %v1006
      %v1008 = vrcp.pop %v954
      %v1009 = vmul.f32 1.0, %v1008
      %v1010 = vrcp.pop %v955
      %v1011 = vmul.f32 1.0, %v1010
      %v1012 = vrcp.pop %v956
      %v1013 = vmul.f32 1.0, %v1012
      %v1014 = vrcp.pop %v957
      %v1015 = vmul.f32 1.0, %v1014
      %v1016 = vrcp.pop %v958
      %v1017 = vmul.f32 1.0, %v1016
      %v1018 = vrcp.pop %v959
      %v1019 = vmul.f32 1.0, %v1018
      %v1020 = vrcp.pop %v960
      %v1021 = vmul.f32 1.0, %v1020
      %v1022 = vrcp.pop %v961
      %v1023 = vmul.f32 1.0, %v1022
      %v1024 = vrcp.pop %v962
      %v1025 = vmul.f32 1.0, %v1024
      %v1026 = vrcp.pop %v963
      %v1027 = vmul.f32 1.0, %v1026
      %v1028 = vmul.f32 %v556, %v965
      %v1029 = vmul.f32 %v557, %v967
      %v1030 = vmul.f32 %v558, %v969
      %v1031 = vmul.f32 %v559, %v971
      %v1032 = vmul.f32 %v560, %v973
      %v1033 = vmul.f32 %v561, %v975
      %v1034 = vmul.f32 %v562, %v977
      %v1035 = vmul.f32 %v563, %v979
      %v1036 = vmul.f32 %v564, %v981
      %v1037 = vmul.f32 %v565, %v983
      %v1038 = vmul.f32 %v566, %v985
      %v1039 = vmul.f32 %v567, %v987
      %v1040 = vmul.f32 %v568, %v989
      %v1041 = vmul.f32 %v569, %v991
      %v1042 = vmul.f32 %v570, %v993
      %v1043 = vmul.f32 %v571, %v995
      %v1044 = vmul.f32 %v572, %v997
      %v1045 = vmul.f32 %v573, %v999
      %v1046 = vmul.f32 %v574, %v1001
      %v1047 = vmul.f32 %v575, %v1003
      %v1048 = vmul.f32 %v576, %v1005
      %v1049 = vmul.f32 %v577, %v1007
      %v1050 = vmul.f32 %v578, %v1009
      %v1051 = vmul.f32 %v579, %v1011
      %v1052 = vmul.f32 %v580, %v1013
      %v1053 = vmul.f32 %v581, %v1015
      %v1054 = vmul.f32 %v582, %v1017
      %v1055 = vmul.f32 %v583, %v1019
      %v1056 = vmul.f32 %v584, %v1021
      %v1057 = vmul.f32 %v585, %v1023
      %v1058 = vmul.f32 %v586, %v1025
      %v1059 = vmul.f32 %v587, %v1027
      %v1060 = vpack.c.bf16 %v1029, %v1028
      %v1061 = vpack.c.bf16 %v1031, %v1030
      %v1062 = vpack.c.bf16 %v1033, %v1032
      %v1063 = vpack.c.bf16 %v1035, %v1034
      %v1064 = vpack.c.bf16 %v1037, %v1036
      %v1065 = vpack.c.bf16 %v1039, %v1038
      %v1066 = vpack.c.bf16 %v1041, %v1040
      %v1067 = vpack.c.bf16 %v1043, %v1042
      %v1068 = vpack.c.bf16 %v1045, %v1044
      %v1069 = vpack.c.bf16 %v1047, %v1046
      %v1070 = vpack.c.bf16 %v1049, %v1048
      %v1071 = vpack.c.bf16 %v1051, %v1050
      %v1072 = vpack.c.bf16 %v1053, %v1052
      %v1073 = vpack.c.bf16 %v1055, %v1054
      %v1074 = vpack.c.bf16 %v1057, %v1056
      %v1075 = vpack.c.bf16 %v1059, %v1058
      %v1076 = vld [vmem:[%s5] sm:$0xf]
      %v1077 = vld [vmem:[%s5 + $0x4] sm:$0xf]
      %v1078 = vld [vmem:[%s5 + $0x8] sm:$0xf]
      %v1079 = vld [vmem:[%s5 + $0xc] sm:$0xf]
      %v1080 = vld [vmem:[%s5 + $0x10] sm:$0xf]
      %v1081 = vld [vmem:[%s5 + $0x14] sm:$0xf]
      %v1082 = vld [vmem:[%s5 + $0x18] sm:$0xf]
      %v1083 = vld [vmem:[%s5 + $0x1c] sm:$0xf]
      %v1084 = vld [vmem:[%s5 + $0x20] sm:$0xf]
      %v1085 = vld [vmem:[%s5 + $0x24] sm:$0xf]
      %v1086 = vld [vmem:[%s5 + $0x28] sm:$0xf]
      %v1087 = vld [vmem:[%s5 + $0x2c] sm:$0xf]
      %v1088 = vld [vmem:[%s5 + $0x30] sm:$0xf]
      %v1089 = vld [vmem:[%s5 + $0x34] sm:$0xf]
      %v1090 = vld [vmem:[%s5 + $0x38] sm:$0xf]
      %v1091 = vld [vmem:[%s5 + $0x3c] sm:$0xf]
      %v1092 = vld [vmem:[%s6] sm:$0x1]
      %v1094 = vlaneseq
      %v1095 = vshrl.u32 %v1094, 7
      %v1096 = vsub.s32 0, %v1095
      %v1097 = vrot.slane %v1092, %v1096
      %v1115 = vunpack.c.l.b16 %v1076
      %v1116 = vunpack.c.l.b16 %v1077
      %v1117 = vunpack.c.l.b16 %v1078
      %v1118 = vunpack.c.l.b16 %v1079
      %v1119 = vunpack.c.l.b16 %v1080
      %v1120 = vunpack.c.l.b16 %v1081
      %v1121 = vunpack.c.l.b16 %v1082
      %v1122 = vunpack.c.l.b16 %v1083
      %v1123 = vunpack.c.l.b16 %v1084
      %v1124 = vunpack.c.l.b16 %v1085
      %v1125 = vunpack.c.l.b16 %v1086
      %v1126 = vunpack.c.l.b16 %v1087
      %v1127 = vunpack.c.l.b16 %v1088
      %v1128 = vunpack.c.l.b16 %v1089
      %v1129 = vunpack.c.l.b16 %v1090
      %v1130 = vunpack.c.l.b16 %v1091
      %v1131 = vpack.c.b16 %v1116, %v1115
      %v1132 = vpack.c.b16 %v1118, %v1117
      %v1133 = vpack.c.b16 %v1120, %v1119
      %v1134 = vpack.c.b16 %v1122, %v1121
      %v1135 = vpack.c.b16 %v1124, %v1123
      %v1136 = vpack.c.b16 %v1126, %v1125
      %v1137 = vpack.c.b16 %v1128, %v1127
      %v1138 = vpack.c.b16 %v1130, %v1129
      %1147 = vmatprep.subr.bf16.mxu0 0
      %1148 = vmatpush1.bf16.msra.mxu0 %v1138
      %1149 = vmatprep.subr.bf16.mxu0 0
      %1150 = vmatpush1.bf16.msra.mxu0 %v1137
      %1151 = vmatprep.subr.bf16.mxu0 0
      %1152 = vmatpush1.bf16.msra.mxu0 %v1136
      %1153 = vmatprep.subr.bf16.mxu0 0
      %1154 = vmatpush1.bf16.msra.mxu0 %v1135
      %1155 = vmatprep.subr.bf16.mxu0 0
      %1156 = vmatpush1.bf16.msra.mxu0 %v1134
      %1157 = vmatprep.subr.bf16.mxu0 0
      %1158 = vmatpush1.bf16.msra.mxu0 %v1133
      %1159 = vmatprep.subr.bf16.mxu0 0
      %1160 = vmatpush1.bf16.msra.mxu0 %v1132
      %1161 = vmatprep.subr.bf16.mxu0 0
      %1162 = vmatpush1.bf16.msra.mxu0 %v1131
      %1163 = vmatprep.subr.bf16.mxu0 0
      %1164 = vmatpush2.bf16.msra.mxu0 0
      %1165 = vmatprep.subr.bf16.mxu0 0
      %1166 = vmatpush2.bf16.msra.mxu0 0
      %1167 = vmatprep.subr.bf16.mxu0 0
      %1168 = vmatpush2.bf16.msra.mxu0 0
      %1169 = vmatprep.subr.bf16.mxu0 0
      %1170 = vmatpush2.bf16.msra.mxu0 0
      %1171 = vmatprep.subr.bf16.mxu0 0
      %1172 = vmatpush2.bf16.msra.mxu0 0
      %1173 = vmatprep.subr.bf16.mxu0 0
      %1174 = vmatpush2.bf16.msra.mxu0 0
      %1175 = vmatprep.subr.bf16.mxu0 0
      %1176 = vmatpush2.bf16.msra.mxu0 0
      %1177 = vmatprep.subr.bf16.mxu0 0
      %1178 = vmatpush2.bf16.msra.mxu0 0
      %1179 = vmatprep.mubr.bf16.mxu0 0
      %1180 = vmatmul.mubr.bf16.gmra.mxu0 %v1060
      %v1181 = vpop.f32.mrf.mxu0
      %v1182 = vadd.f32 %v1097, %v1181
      %v1183 = vpop.f32.mrf.mxu0
      %v1184 = vpop.f32.mrf.mxu0
      %v1185 = vadd.f32 %v1097, %v1184
      %v1186 = vpop.f32.mrf.mxu0
      %1187 = vmatprep.mubr.bf16.mxu0 0
      %1188 = vmatmul.mubr.bf16.gmra.mxu0 %v1061
      %v1189 = vpop.f32.mrf.mxu0
      %v1190 = vadd.f32 %v1097, %v1189
      %v1191 = vpop.f32.mrf.mxu0
      %v1192 = vpop.f32.mrf.mxu0
      %v1193 = vadd.f32 %v1097, %v1192
      %v1194 = vpop.f32.mrf.mxu0
      %1195 = vmatprep.mubr.bf16.mxu0 0
      %1196 = vmatmul.mubr.bf16.gmra.mxu0 %v1062
      %v1197 = vpop.f32.mrf.mxu0
      %v1198 = vadd.f32 %v1097, %v1197
      %v1199 = vpop.f32.mrf.mxu0
      %v1200 = vpop.f32.mrf.mxu0
      %v1201 = vadd.f32 %v1097, %v1200
      %v1202 = vpop.f32.mrf.mxu0
      %1203 = vmatprep.mubr.bf16.mxu0 0
      %1204 = vmatmul.mubr.bf16.gmra.mxu0 %v1063
      %v1205 = vpop.f32.mrf.mxu0
      %v1206 = vadd.f32 %v1097, %v1205
      %v1207 = vpop.f32.mrf.mxu0
      %v1208 = vpop.f32.mrf.mxu0
      %v1209 = vadd.f32 %v1097, %v1208
      %v1210 = vpop.f32.mrf.mxu0
      %1211 = vmatprep.mubr.bf16.mxu0 0
      %1212 = vmatmul.mubr.bf16.gmra.mxu0 %v1064
      %v1213 = vpop.f32.mrf.mxu0
      %v1214 = vadd.f32 %v1097, %v1213
      %v1215 = vpop.f32.mrf.mxu0
      %v1216 = vpop.f32.mrf.mxu0
      %v1217 = vadd.f32 %v1097, %v1216
      %v1218 = vpop.f32.mrf.mxu0
      %1219 = vmatprep.mubr.bf16.mxu0 0
      %1220 = vmatmul.mubr.bf16.gmra.mxu0 %v1065
      %v1221 = vpop.f32.mrf.mxu0
      %v1222 = vadd.f32 %v1097, %v1221
      %v1223 = vpop.f32.mrf.mxu0
      %v1224 = vpop.f32.mrf.mxu0
      %v1225 = vadd.f32 %v1097, %v1224
      %v1226 = vpop.f32.mrf.mxu0
      %1227 = vmatprep.mubr.bf16.mxu0 0
      %1228 = vmatmul.mubr.bf16.gmra.mxu0 %v1066
      %v1229 = vpop.f32.mrf.mxu0
      %v1230 = vadd.f32 %v1097, %v1229
      %v1231 = vpop.f32.mrf.mxu0
      %v1232 = vpop.f32.mrf.mxu0
      %v1233 = vadd.f32 %v1097, %v1232
      %v1234 = vpop.f32.mrf.mxu0
      %1235 = vmatprep.mubr.bf16.mxu0 0
      %1236 = vmatmul.mubr.bf16.gmra.mxu0 %v1067
      %v1237 = vpop.f32.mrf.mxu0
      %v1238 = vadd.f32 %v1097, %v1237
      %v1239 = vpop.f32.mrf.mxu0
      %v1240 = vpop.f32.mrf.mxu0
      %v1241 = vadd.f32 %v1097, %v1240
      %v1242 = vpop.f32.mrf.mxu0
      %1243 = vmatprep.mubr.bf16.mxu0 0
      %1244 = vmatmul.mubr.bf16.gmra.mxu0 %v1068
      %v1245 = vpop.f32.mrf.mxu0
      %v1246 = vadd.f32 %v1097, %v1245
      %v1247 = vpop.f32.mrf.mxu0
      %v1248 = vpop.f32.mrf.mxu0
      %v1249 = vadd.f32 %v1097, %v1248
      %v1250 = vpop.f32.mrf.mxu0
      %1251 = vmatprep.mubr.bf16.mxu0 0
      %1252 = vmatmul.mubr.bf16.gmra.mxu0 %v1069
      %v1253 = vpop.f32.mrf.mxu0
      %v1254 = vadd.f32 %v1097, %v1253
      %v1255 = vpop.f32.mrf.mxu0
      %v1256 = vpop.f32.mrf.mxu0
      %v1257 = vadd.f32 %v1097, %v1256
      %v1258 = vpop.f32.mrf.mxu0
      %1259 = vmatprep.mubr.bf16.mxu0 0
      %1260 = vmatmul.mubr.bf16.gmra.mxu0 %v1070
      %v1261 = vpop.f32.mrf.mxu0
      %v1262 = vadd.f32 %v1097, %v1261
      %v1263 = vpop.f32.mrf.mxu0
      %v1264 = vpop.f32.mrf.mxu0
      %v1265 = vadd.f32 %v1097, %v1264
      %v1266 = vpop.f32.mrf.mxu0
      %1267 = vmatprep.mubr.bf16.mxu0 0
      %1268 = vmatmul.mubr.bf16.gmra.mxu0 %v1071
      %v1269 = vpop.f32.mrf.mxu0
      %v1270 = vadd.f32 %v1097, %v1269
      %v1271 = vpop.f32.mrf.mxu0
      %v1272 = vpop.f32.mrf.mxu0
      %v1273 = vadd.f32 %v1097, %v1272
      %v1274 = vpop.f32.mrf.mxu0
      %1275 = vmatprep.mubr.bf16.mxu0 0
      %1276 = vmatmul.mubr.bf16.gmra.mxu0 %v1072
      %v1277 = vpop.f32.mrf.mxu0
      %v1278 = vadd.f32 %v1097, %v1277
      %v1279 = vpop.f32.mrf.mxu0
      %v1280 = vpop.f32.mrf.mxu0
      %v1281 = vadd.f32 %v1097, %v1280
      %v1282 = vpop.f32.mrf.mxu0
      %1283 = vmatprep.mubr.bf16.mxu0 0
      %1284 = vmatmul.mubr.bf16.gmra.mxu0 %v1073
      %v1285 = vpop.f32.mrf.mxu0
      %v1286 = vadd.f32 %v1097, %v1285
      %v1287 = vpop.f32.mrf.mxu0
      %v1288 = vpop.f32.mrf.mxu0
      %v1289 = vadd.f32 %v1097, %v1288
      %v1290 = vpop.f32.mrf.mxu0
      %1291 = vmatprep.mubr.bf16.mxu0 0
      %1292 = vmatmul.mubr.bf16.gmra.mxu0 %v1074
      %v1293 = vpop.f32.mrf.mxu0
      %v1294 = vadd.f32 %v1097, %v1293
      %v1295 = vpop.f32.mrf.mxu0
      %v1296 = vpop.f32.mrf.mxu0
      %v1297 = vadd.f32 %v1097, %v1296
      %v1298 = vpop.f32.mrf.mxu0
      %1299 = vmatprep.mubr.bf16.mxu0 0
      %1300 = vmatmul.mubr.bf16.gmra.mxu0 %v1075
      %v1301 = vpop.f32.mrf.mxu0
      %v1302 = vadd.f32 %v1097, %v1301
      %v1303 = vpop.f32.mrf.mxu0
      %v1304 = vpop.f32.mrf.mxu0
      %v1305 = vadd.f32 %v1097, %v1304
      %v1306 = vpop.f32.mrf.mxu0
      %1307 = vdwg.mxu0
      %1308 = vst.msk [vmem:[%s280] sm:$0xff] %vm346, %v1182
      %1309 = vst.msk [vmem:[%s280 + $0x8] sm:$0xff] %vm346, %v1185
      %1310 = vst.msk [vmem:[%s280 + $0x10] sm:$0xff] %vm346, %v1190
      %1311 = vst.msk [vmem:[%s280 + $0x18] sm:$0xff] %vm346, %v1193
      %1312 = vst.msk [vmem:[%s280 + $0x20] sm:$0xff] %vm346, %v1198
      %1313 = vst.msk [vmem:[%s280 + $0x28] sm:$0xff] %vm346, %v1201
      %1314 = vst.msk [vmem:[%s280 + $0x30] sm:$0xff] %vm346, %v1206
      %1315 = vst.msk [vmem:[%s280 + $0x38] sm:$0xff] %vm346, %v1209
      %1316 = vst.msk [vmem:[%s280 + $0x40] sm:$0xff] %vm346, %v1214
      %1317 = vst.msk [vmem:[%s280 + $0x48] sm:$0xff] %vm346, %v1217
      %1318 = vst.msk [vmem:[%s280 + $0x50] sm:$0xff] %vm346, %v1222
      %1319 = vst.msk [vmem:[%s280 + $0x58] sm:$0xff] %vm346, %v1225
      %1320 = vst.msk [vmem:[%s280 + $0x60] sm:$0xff] %vm346, %v1230
      %1321 = vst.msk [vmem:[%s280 + $0x68] sm:$0xff] %vm346, %v1233
      %1322 = vst.msk [vmem:[%s280 + $0x70] sm:$0xff] %vm346, %v1238
      %1323 = vst.msk [vmem:[%s280 + $0x78] sm:$0xff] %vm346, %v1241
      %1324 = vst.msk [vmem:[%s280 + $0x80] sm:$0xff] %vm346, %v1246
      %1325 = vst.msk [vmem:[%s280 + $0x88] sm:$0xff] %vm346, %v1249
      %1326 = vst.msk [vmem:[%s280 + $0x90] sm:$0xff] %vm346, %v1254
      %1327 = vst.msk [vmem:[%s280 + $0x98] sm:$0xff] %vm346, %v1257
      %1328 = vst.msk [vmem:[%s280 + $0xa0] sm:$0xff] %vm346, %v1262
      %1329 = vst.msk [vmem:[%s280 + $0xa8] sm:$0xff] %vm346, %v1265
      %1330 = vst.msk [vmem:[%s280 + $0xb0] sm:$0xff] %vm346, %v1270
      %1331 = vst.msk [vmem:[%s280 + $0xb8] sm:$0xff] %vm346, %v1273
      %1332 = vst.msk [vmem:[%s280 + $0xc0] sm:$0xff] %vm346, %v1278
      %1333 = vst.msk [vmem:[%s280 + $0xc8] sm:$0xff] %vm346, %v1281
      %1334 = vst.msk [vmem:[%s280 + $0xd0] sm:$0xff] %vm346, %v1286
      %1335 = vst.msk [vmem:[%s280 + $0xd8] sm:$0xff] %vm346, %v1289
      %1336 = vst.msk [vmem:[%s280 + $0xe0] sm:$0xff] %vm346, %v1294
      %1337 = vst.msk [vmem:[%s280 + $0xe8] sm:$0xff] %vm346, %v1297
      %1338 = vst.msk [vmem:[%s280 + $0xf0] sm:$0xff] %vm346, %v1302
      %1339 = vst.msk [vmem:[%s280 + $0xf8] sm:$0xff] %vm346, %v1305
      %s1340 = smul.u32 32, %s18
      %p1341 = scmp.lt.s32.totalorder %s1340, 63
      %s1342 = scalar_select %p1341, %s1340, 63
      %s1343 = smul.addr %s1342, 8
      %s1344 = scalar_lea.vmem %s7, %s1343
      // Predicated region
      $region49: #{tpu_custom_call.1} parent=47 // pred_check
        %p1345 = pneg %p188
      $region50: #{tpu_custom_call.1} parent=47 // pred_check_branch
        %1347 = sbr.rel (%p1345) target = $region52
      $region51: #{tpu_custom_call.1} parent=47 // pred_region
        %s1348 = smul.u32 32, %s18
      $region52: #{tpu_custom_call.1} parent=47 // pred_fallthru
        _
    $region48: #{tpu_custom_call.1} parent=5 // pred_fallthru
      _
    %p1349 = scmp.le.s32.totalorder 2, %s13
    // Predicated region
    $region53: #{tpu_custom_call.1} parent=5 // pred_check
      %p1350 = pneg %p1349
    $region54: #{tpu_custom_call.1} parent=5 // pred_check_branch
      %1352 = sbr.rel (%p1350) target = $region56
    $region55: #{tpu_custom_call.1} parent=5 // pred_region
      %s1353 = ssub.s32 %s13, 2
      // Predicated region
      $region57: #{tpu_custom_call.1} parent=55 // pred_check
        %p1354 = pneg %p194
      $region58: #{tpu_custom_call.1} parent=55 // pred_check_branch
        %1356 = sbr.rel (%p1354) target = $region60
      $region59: #{tpu_custom_call.1} parent=55 // pred_region
        %s1357 = smul.u32 32, %s19
        %p1358 = scmp.lt.s32.totalorder %s1357, 63
        %s1359 = scalar_select %p1358, %s1357, 63
        %s1360 = smul.addr %s1359, 8
        %s1361 = scalar_lea.vmem %s7, %s1360
      $region60: #{tpu_custom_call.1} parent=55 // pred_fallthru
        _
    $region56: #{tpu_custom_call.1} parent=5 // pred_fallthru
      _
  $region6: #{tpu_custom_call.1} parent=0 // loop_footer
    %s17 = sadd.s32 1, %s13
  $region7: #{tpu_custom_call.1} parent=0 // loop_footer_branch
    %12 = sbr.rel target = $region3
  $region8: #{tpu_custom_call.1} parent=0 // loop_exit
    _

</llo_original>
